<compile_context>
chip_gen: v5e
topology: v5e:2x2
jax: 0.10.0
libtpu: 0.0.40
codegen_flags: <defaults>
</compile_context>

<pallas_src>
import math
import functools

import jax
import jax.numpy as jnp
import numpy as np
from jax.experimental import pallas as pl
from jax.experimental.pallas import tpu as pltpu


def _build_pe_table(d_model: int, max_seq_len: int) -> jnp.ndarray:
    """Deterministic positional-encoding buffer, identical to the PyTorch init."""
    pos = np.arange(max_seq_len, dtype=np.float64)[:, None]          # [S, 1]
    i = np.arange(0, d_model, 2, dtype=np.float64)[None, :]          # [1, D/2]
    angle = pos / np.power(10000.0, i / d_model)                     # [S, D/2]
    pe = np.zeros((max_seq_len, d_model), dtype=np.float32)
    pe[:, 0::2] = np.sin(angle)
    pe[:, 1::2] = np.cos(angle)
    return jnp.asarray(pe)                                           # [S, D] f32


# ----------------------------------------------------------------------------
# VMEM budgeting (generation-aware tile sizing)
# ----------------------------------------------------------------------------
_FALLBACK_VMEM_CAP = 64 * 1024 * 1024   # v7x physical VMEM (smallest generation)


def _vmem_capacity_bytes() -> int:
    try:
        cap = getattr(pltpu.get_tpu_info(), "vmem_capacity_bytes", None)
        if cap:
            return int(cap)
    except Exception:
        pass
    return _FALLBACK_VMEM_CAP


def _tiling_budget():
    """Returns (vmem_limit_bytes, target_bytes_per_block)."""
    cap = _vmem_capacity_bytes()
    vmem_limit = min(int(cap * 0.75), 100 * 1024 * 1024)
    # 6 double-buffered blocks (x, out, pe) must fit with headroom under limit.
    per_block = max(512 * 1024, min(vmem_limit // 8, 8 * 1024 * 1024))
    return vmem_limit, per_block


# ----------------------------------------------------------------------------
# Kernel body: fused scale + broadcast-add (2D tiles; pe broadcasts over rows
# when it arrives as a (1, TC) block in the flattened path).
# ----------------------------------------------------------------------------
def _pe_kernel(x_ref, pe_ref, o_ref, *, scale: float):
    o_ref[...] = (x_ref[...] * scale + pe_ref[...]).astype(o_ref.dtype)


# ----------------------------------------------------------------------------
# Path A: d_model % 128 == 0 and seq % 8 == 0  ->  tile the sequence axis,
# window pe straight from the full table (no wrapper slice).
# ----------------------------------------------------------------------------
def _positional_encoder_seq_tiled(x, pe, scale):
    B, S, D = x.shape
    itemsize = x.dtype.itemsize
    vmem_limit, per_block = _tiling_budget()

    ts = per_block // (D * itemsize)
    ts = max(8, (ts // 8) * 8)
    ts = min(ts, S)                                  # S is a multiple of 8 here

    grid = (B, pl.cdiv(S, ts))
    kernel = functools.partial(_pe_kernel, scale=scale)
    return pl.pallas_call(
        kernel,
        out_shape=jax.ShapeDtypeStruct((B, S, D), x.dtype),
        grid_spec=pltpu.PrefetchScalarGridSpec(
            num_scalar_prefetch=0,
            grid=grid,
            in_specs=[
                # batch dim squeezed -> kernel sees (ts, D) tiles
                pl.BlockSpec((None, ts, D), lambda b, s: (b, s, 0)),
                # pe windowed from the FULL (max_seq_len, D) table
                pl.BlockSpec((ts, D), lambda b, s: (s, 0)),
            ],
            out_specs=pl.BlockSpec((None, ts, D), lambda b, s: (b, s, 0)),
        ),
        compiler_params=pltpu.CompilerParams(
            dimension_semantics=("parallel", "parallel"),
            vmem_limit_bytes=vmem_limit,
        ),
    )(x, pe)


# ----------------------------------------------------------------------------
# Path B: small / non-128-multiple d_model -> flatten to (B, S*D) so the output
# last dim is lane-dense, batch multiple rows per block to amortize grid steps.
# ----------------------------------------------------------------------------
def _positional_encoder_flat(x, pe, scale):
    B, S, D = x.shape
    itemsize = x.dtype.itemsize
    vmem_limit, per_block = _tiling_budget()

    cols = S * D
    x2d = x.reshape(B, cols)
    pe2d = pe[:S].reshape(1, cols)    # one small slice+reshape; << x HBM traffic

    if cols < 128:
        tc = cols                                      # full extent (tiny case)
    else:
        tc = min(cols, per_block // itemsize)
        tc = max(128, (tc // 128) * 128)               # lane-dense column tile

    rows_per_block = max(1, per_block // (tc * itemsize))
    if B <= rows_per_block or B <= 8:
        tb = B                                         # full extent
    else:
        tb = max(8, (min(B, rows_per_block) // 8) * 8)

    grid = (pl.cdiv(B, tb), pl.cdiv(cols, tc))
    kernel = functools.partial(_pe_kernel, scale=scale)
    out2d = pl.pallas_call(
        kernel,
        out_shape=jax.ShapeDtypeStruct((B, cols), x.dtype),
        grid_spec=pltpu.PrefetchScalarGridSpec(
            num_scalar_prefetch=0,
            grid=grid,
            in_specs=[
                pl.BlockSpec((tb, tc), lambda r, c: (r, c)),
                pl.BlockSpec((1, tc), lambda r, c: (0, c)),   # shared pe row
            ],
            out_specs=pl.BlockSpec((tb, tc), lambda r, c: (r, c)),
        ),
        compiler_params=pltpu.CompilerParams(
            dimension_semantics=("parallel", "parallel"),
            vmem_limit_bytes=vmem_limit,
        ),
    )(x2d, pe2d)
    return out2d.reshape(B, S, D)


# ----------------------------------------------------------------------------
# Public wrapper (forward of PositionalEncoder)
# ----------------------------------------------------------------------------
def positional_encoder(x: jnp.ndarray, pe: jnp.ndarray, d_model: int = None) -> jnp.ndarray:
    """x: [B, S, D]; pe: [max_seq_len, D]. Returns x*sqrt(d_model) + pe[:S]."""
    B, S, D = x.shape
    if d_model is not None:
        assert D == d_model
    assert S <= pe.shape[0]
    scale = float(math.sqrt(D))
    if pe.dtype != x.dtype:
        pe = pe.astype(x.dtype)      # keep HBM traffic at the activation dtype

    if D % 128 == 0 and S % 8 == 0:
        return _positional_encoder_seq_tiled(x, pe, scale)
    return _positional_encoder_flat(x, pe, scale)


if __name__ == "__main__":
    key = jax.random.PRNGKey(0)
    k1, k2 = jax.random.split(key)

    # Case 1: small shapes (d_model=32 not a multiple of 128 -> flattened path).
    d_model, max_seq_len, batch, seq = 32, 16, 2, 8
    x1 = jax.random.normal(k1, (batch, seq, d_model), dtype=jnp.float32)
    pe1 = _build_pe_table(d_model, max_seq_len)
    out1 = jax.block_until_ready(positional_encoder(x1, pe1, d_model))
    ref1 = x1 * math.sqrt(d_model) + pe1[:seq][None, :, :]
    np.testing.assert_allclose(np.asarray(out1), np.asarray(ref1), rtol=1e-6, atol=1e-6)

    # Case 2: lane-dense d_model (multiple of 128) -> sequence-tiled path.
    d_model2, max_seq_len2, batch2, seq2 = 128, 32, 2, 16
    x2 = jax.random.normal(k2, (batch2, seq2, d_model2), dtype=jnp.float32)
    pe2 = _build_pe_table(d_model2, max_seq_len2)
    out2 = jax.block_until_ready(positional_encoder(x2, pe2, d_model2))
    ref2 = x2 * math.sqrt(d_model2) + pe2[:seq2][None, :, :]
    np.testing.assert_allclose(np.asarray(out2), np.asarray(ref2), rtol=1e-6, atol=1e-6)

    print("KERNEL_OK")
</pallas_src>

<mosaic_0001>
module attributes {stable_mosaic.version = 11 : i64} {
  func.func @_pe_kernel(%arg0: i32, %arg1: i32, %arg2: memref<2x256xf32, #tpu.memory_space<vmem>>, %arg3: memref<1x256xf32, #tpu.memory_space<vmem>>, %arg4: memref<2x256xf32, #tpu.memory_space<vmem>>) attributes {dimension_semantics = [#tpu.dimension_semantics<parallel>, #tpu.dimension_semantics<parallel>], iteration_bounds = array<i64: 1, 1>, scalar_prefetch = 0 : i64, scratch_operands = 0 : i64, tpu.core_type = #tpu.core_type<tc>, window_params = [{transform_indices = @transform_0, window_bounds = array<i64: 2, 256>}, {transform_indices = @transform_1, window_bounds = array<i64: 1, 256>}, {transform_indices = @transform_2, window_bounds = array<i64: 2, 256>}]} {
    %c0 = arith.constant 0 : index
    %c0_0 = arith.constant 0 : index
    %0 = vector.load %arg2[%c0, %c0_0] : memref<2x256xf32, #tpu.memory_space<vmem>>, vector<2x256xf32>
    %cst = arith.constant 5.65685415 : f32
    %1 = vector.broadcast %cst : f32 to vector<2x256xf32>
    %2 = arith.mulf %0, %1 : vector<2x256xf32>
    %c0_1 = arith.constant 0 : index
    %c0_2 = arith.constant 0 : index
    %3 = vector.load %arg3[%c0_1, %c0_2] : memref<1x256xf32, #tpu.memory_space<vmem>>, vector<1x256xf32>
    %4 = vector.broadcast %3 : vector<1x256xf32> to vector<2x256xf32>
    %5 = arith.addf %2, %4 : vector<2x256xf32>
    %c0_3 = arith.constant 0 : index
    %c0_4 = arith.constant 0 : index
    %6 = vector.load %arg4[%c0_3, %c0_4] : memref<2x256xf32, #tpu.memory_space<vmem>>, vector<2x256xf32>
    tpu.vector_store %arg4[%c0_3, %c0_4], %5 {strides = array<i32>} : memref<2x256xf32, #tpu.memory_space<vmem>>, vector<2x256xf32>,
    return
  }
  func.func @transform_0(%arg0: i32, %arg1: i32) -> (i32, i32) {
    %c0_i32 = arith.constant 0 : i32
    return %arg0, %arg1 : i32, i32
  }
  func.func @transform_1(%arg0: i32, %arg1: i32) -> (i32, i32) {
    %c0_i32 = arith.constant 0 : i32
    %c0_i32_0 = arith.constant 0 : i32
    return %c0_i32, %arg1 : i32, i32
  }
  func.func @transform_2(%arg0: i32, %arg1: i32) -> (i32, i32) {
    %c0_i32 = arith.constant 0 : i32
    return %arg0, %arg1 : i32, i32
  }
}

</mosaic_0001>

<llo_original>
// kernel: tpu_custom_call.1
$region0: #{tpu_custom_call.1}
  #allocation0 [shape = 'u32[]', space=smem, size = 0x4, offset = 0x4, fixed_abs, tag = 'smem constant byte address 0x4 - core index']
  #allocation1 [shape = 'u32[72,128]{1,0:T(1,128)}', space=vmem, size = 0x9000, scoped, tag = 'internal scratch']
  %s0 = inlined_call_operand.hbm [shape: f32[2,256], index: 0, kind: input, shape index: {}]
  %s1 = inlined_call_operand.hbm [shape: f32[1,256], index: 1, kind: input, shape index: {}]
  %s2 = inlined_call_operand.hbm [shape: f32[2,256], index: 2, kind: output, shape index: {}]
  %s3 = sld [smem:[#allocation0]]
  $region26: #{tpu_custom_call.1} parent=0
    _
  %s5 = ssub.s32 1, %s3
  %s6 = scalar_select 0, %s5, %s3
  $region1: #{tpu_custom_call.1} parent=0
    #allocation2 [shape = 'u8[2048]{0}', space=vmem, size = 0x800, scoped, tag = 'input window, operand 0, single buffered']
    #allocation3 [shape = 's32[1]{0}', space=sflag, size = 0x4, scoped, tag = 'scoped memory for tpu_custom_call.1']
    #allocation4 [shape = 's32[1]{0}', space=sflag, size = 0x4, scoped, tag = 'scoped memory for tpu_custom_call.1']
    #allocation5 [shape = 'u8[1024]{0}', space=vmem, size = 0x400, scoped, tag = 'input window, operand 1, single buffered']
    #allocation6 [shape = 's32[1]{0}', space=sflag, size = 0x4, scoped, tag = 'scoped memory for tpu_custom_call.1']
    #allocation7 [shape = 'u8[2048]{0}', space=vmem, size = 0x800, scoped, tag = 'output window, operand 0, single buffered']
    %7 = vsyncpa [#allocation3], 0
    %8 = vsyncpa [#allocation6], 0
    %9 = vsyncpa [#allocation4], 0
    // Predicated region
    $region2: #{tpu_custom_call.1} parent=1 // pred_check
      _
    $region3: #{tpu_custom_call.1} parent=1 // pred_check_branch
      %11 = sbr.rel (0) target = $region5
    $region4: #{tpu_custom_call.1} parent=1 // pred_region
      %13 = vsyncadd [#allocation3], 0
      %s15 = sshll.u32 %s0, 4
      %s16 = int_to_ptr.hbm [resolvable:$true] %s15
      %s17 = sshll.u32 [#allocation2], 4
      %s18 = int_to_ptr.vmem [resolvable:$true] %s17
      %20 = dma.hbm_to_vmem [thread:$0]  %s16, 64, %s18, [#allocation3]
    $region5: #{tpu_custom_call.1} parent=1 // pred_fallthru
      _
    // Predicated region
    $region6: #{tpu_custom_call.1} parent=1 // pred_check
      _
    $region7: #{tpu_custom_call.1} parent=1 // pred_check_branch
      %22 = sbr.rel (0) target = $region9
    $region8: #{tpu_custom_call.1} parent=1 // pred_region
      %24 = vsyncadd [#allocation6], 0
      %s26 = sshll.u32 %s1, 4
      %s27 = int_to_ptr.hbm [resolvable:$true] %s26
      %s28 = sshll.u32 [#allocation5], 4
      %s29 = int_to_ptr.vmem [resolvable:$true] %s28
      %31 = dma.hbm_to_vmem [thread:$0]  %s27, 32, %s29, [#allocation6]
    $region9: #{tpu_custom_call.1} parent=1 // pred_fallthru
      _
    // Predicated region
    $region10: #{tpu_custom_call.1} parent=1 // pred_check
      _
    $region11: #{tpu_custom_call.1} parent=1 // pred_check_branch
      %33 = sbr.rel (0) target = $region13
    $region12: #{tpu_custom_call.1} parent=1 // pred_region
      %35 = dma.done [#allocation3], 64
    $region13: #{tpu_custom_call.1} parent=1 // pred_fallthru
      _
    // Predicated region
    $region14: #{tpu_custom_call.1} parent=1 // pred_check
      _
    $region15: #{tpu_custom_call.1} parent=1 // pred_check_branch
      %37 = sbr.rel (0) target = $region17
    $region16: #{tpu_custom_call.1} parent=1 // pred_region
      %39 = dma.done [#allocation6], 32
    $region17: #{tpu_custom_call.1} parent=1 // pred_fallthru
      _
    %v40 = vld [vmem:[#allocation2] sm:$0xf]
    %v41 = vmul.f32 %v40, 5.656854
    %v42 = vld [vmem:[#allocation5] sm:$0x3]
    %v44 = vperm.slane %v42, 0
    %v45 = vperm.slane %v42, 1
    %v46 = vrot.slane %v45, 6
    %vm47 = vcmask 1041408
    %v48 = vsel %vm47, %v44, %v46
    %v50 = vadd.f32 %v41, %v48
    %51 = vst [vmem:[#allocation7] sm:$0xf] %v50
    // Predicated region
    $region18: #{tpu_custom_call.1} parent=1 // pred_check
      _
    $region19: #{tpu_custom_call.1} parent=1 // pred_check_branch
      %53 = sbr.rel (0) target = $region21
    $region20: #{tpu_custom_call.1} parent=1 // pred_region
      %55 = vsyncadd [#allocation4], 0
      %s57 = sshll.u32 [#allocation7], 4
      %s58 = int_to_ptr.vmem [resolvable:$true] %s57
      %s59 = sshll.u32 %s2, 4
      %s60 = int_to_ptr.hbm [resolvable:$true] %s59
      %62 = dma.vmem_to_hbm [thread:$0]  %s58, 64, %s60, [#allocation4]
    $region21: #{tpu_custom_call.1} parent=1 // pred_fallthru
      _
    // Predicated region
    $region22: #{tpu_custom_call.1} parent=1 // pred_check
      _
    $region23: #{tpu_custom_call.1} parent=1 // pred_check_branch
      %64 = sbr.rel (0) target = $region25
    $region24: #{tpu_custom_call.1} parent=1 // pred_region
      %66 = dma.done [#allocation4], 64
    $region25: #{tpu_custom_call.1} parent=1 // pred_fallthru
      _
    %67 = vsyncpa [#allocation3], 1
    %68 = vsyncpa [#allocation6], 1
    %69 = vsyncpa [#allocation4], 1

</llo_original>
